<compile_context>
chip_gen: v7x
topology: tpu7x:2x2x1
jax: 0.10.0
libtpu: 0.0.40
codegen_flags: <defaults>
</compile_context>

<pallas_src>
import jax
import jax.numpy as jnp
from jax import lax
from jax.experimental import pallas as pl
from jax.experimental.pallas import tpu as pltpu

B, S, E, H, HID = 2, 8, 32, 32, 256     # batch, seq, emb dim, hidden dim, clf hidden
VOCAB = 100
VOCAB_PAD = 128                          # lane-padded vocab for the one-hot gather matmul
COS_EPS = 1e-8
OUT_LANES = 128                          # lane-dense output width (wrapper slices col 0)


def siamese_kernel(ids_ref,     # (2*B*S, 1)      int32, both branches stacked
                   mask_ref,    # (2*B*S, 1)      f32 attention mask (stacked)
                   emb_ref,     # (VOCAB_PAD, E)  padded embedding table
                   we_ref,      # (E, H)          stand-in encoder weight
                   pool_ref,    # (2*B, 2*B*S)    precomputed mean-pooling matrix (1/S)
                   w1_ref,      # (4*H, HID)      classifier W1 without cosine row
                   small_ref,   # (8, HID)        [w1 cos-row, b1, w2^T, b2 bcast, be|0, 0...]
                   out_ref):    # (B, OUT_LANES)
    small = small_ref[...]
    w1c = small[0:1, :]                   # (1, HID) cosine column of W1
    b1 = small[1:2, :]                    # (1, HID)
    w2row = small[2:3, :]                 # (1, HID) = W2^T
    b2 = small[3:4, 0:1]                  # (1, 1)
    be_row = small[4:5, 0:H]              # (1, H)   encoder bias

    # ---- fused embedding gather + mask (one-hot matmul, removes wrapper HLOs)
    ids = ids_ref[...]                                                  # (2BS, 1) i32
    vocab_iota = lax.broadcasted_iota(jnp.int32, (2 * B * S, VOCAB_PAD), 1)
    onehot = jnp.where(vocab_iota == ids, mask_ref[...], 0.0)           # mask folded in
    x = jnp.dot(onehot, emb_ref[...], preferred_element_type=jnp.float32)  # (2BS, E)

    # ---- synthetic encoder: one matmul + bias + tanh for BOTH branches ------
    h = jnp.tanh(jnp.dot(x, we_ref[...], preferred_element_type=jnp.float32)
                 + be_row)                                              # (2BS, H)

    # ---- mean pooling via precomputed tiny matmul (no iota/where per call) --
    reps = jnp.dot(pool_ref[...], h, preferred_element_type=jnp.float32)  # (2B, H)
    rep1 = reps[:B, :]
    rep2 = reps[B:, :]

    # ---- pairwise features ---------------------------------------------------
    diff = jnp.abs(rep1 - rep2)
    prod = rep1 * rep2
    dot = jnp.sum(prod, axis=-1, keepdims=True)                         # (B, 1)
    n1sq = jnp.sum(rep1 * rep1, axis=-1, keepdims=True)
    n2sq = jnp.sum(rep2 * rep2, axis=-1, keepdims=True)
    # single exact rsqrt: dot / max(||r1||*||r2||, eps)
    cos = dot * lax.rsqrt(jnp.maximum(n1sq * n2sq, COS_EPS * COS_EPS))

    # ---- classifier: ONE K=4H matmul on the concatenated features -----------
    combined = jnp.concatenate([rep1, rep2, diff, prod], axis=-1)       # (B, 4H)
    hidden = (jnp.dot(combined, w1_ref[...], preferred_element_type=jnp.float32)
              + cos * w1c + b1)
    hidden = jnp.maximum(hidden, 0.0)                                   # ReLU

    # ---- last layer as VPU multiply + lane reduce (no (256,1) MXU op) -------
    out = jnp.sum(hidden * w2row, axis=-1, keepdims=True) + b2          # (B, 1)
    out_ref[...] = jnp.broadcast_to(out, (B, OUT_LANES))                # lane-dense store


def pack_params(emb_table, params):
    """One-time packing of static parameters (hoisted out of the per-call path)."""
    we, be, w1, b1, w2, b2 = params

    emb_pad = jnp.zeros((VOCAB_PAD, E), jnp.float32).at[:VOCAB, :].set(emb_table)

    w1_main = w1[:4 * H, :]                                             # (4H, HID)

    small = jnp.zeros((8, HID), jnp.float32)
    small = small.at[0, :].set(w1[4 * H, :])                            # cos row of W1
    small = small.at[1, :].set(b1)                                      # b1
    small = small.at[2, :].set(w2[:, 0])                                # W2^T
    small = small.at[3, :].set(jnp.full((HID,), b2[0], jnp.float32))    # b2 broadcast
    small = small.at[4, :H].set(be.reshape(-1))                         # encoder bias

    rows = jnp.arange(2 * B)[:, None]
    cols = jnp.arange(2 * B * S)[None, :]
    pool = jnp.where((cols >= rows * S) & (cols < (rows + 1) * S),
                     1.0 / S, 0.0).astype(jnp.float32)                  # (2B, 2BS)

    return (emb_pad, we, pool, w1_main, small)


def siamese_forward(input_ids_1, attention_mask_1, input_ids_2, attention_mask_2,
                    packed):
    emb_pad, we, pool, w1_main, small = packed

    # tiny per-call glue: stack both branches into (2BS, 1) columns
    ids = jnp.concatenate([input_ids_1, input_ids_2], axis=0) \
             .reshape(2 * B * S, 1).astype(jnp.int32)
    msk = jnp.concatenate([attention_mask_1, attention_mask_2], axis=0) \
             .reshape(2 * B * S, 1).astype(jnp.float32)

    vmem = pl.BlockSpec(memory_space=pltpu.MemorySpace.VMEM)

    out = pl.pallas_call(
        siamese_kernel,
        out_shape=jax.ShapeDtypeStruct((B, OUT_LANES), jnp.float32),
        in_specs=[vmem] * 7,
        out_specs=vmem,
    )(ids, msk, emb_pad, we, pool, w1_main, small)
    return out[:, 0]                            # torch: out.squeeze(1)


def reference_forward(e1, e2, params):
    """Pure-JAX reference matching the PyTorch forward (eval mode)."""
    we, be, w1, b1, w2, b2 = params
    h1 = jnp.tanh(e1 @ we + be)                 # stand-in encoder
    h2 = jnp.tanh(e2 @ we + be)
    rep1 = jnp.mean(h1, axis=1)
    rep2 = jnp.mean(h2, axis=1)
    diff = jnp.abs(rep1 - rep2)
    prod = rep1 * rep2
    dot = jnp.sum(rep1 * rep2, axis=-1, keepdims=True)
    n1 = jnp.sqrt(jnp.sum(rep1 * rep1, axis=-1, keepdims=True))
    n2 = jnp.sqrt(jnp.sum(rep2 * rep2, axis=-1, keepdims=True))
    cos = dot / jnp.maximum(n1 * n2, COS_EPS)
    combined = jnp.concatenate([rep1, rep2, diff, prod, cos], axis=1)
    hidden = jnp.maximum(combined @ w1 + b1, 0.0)
    out = hidden @ w2 + b2
    return out[:, 0]


if __name__ == "__main__":
    key = jax.random.PRNGKey(0)
    k_emb, k_we, k_be, k_w1, k_b1, k_w2, k_b2, k_id1, k_id2 = jax.random.split(key, 9)

    # deterministic parameters
    emb_table = jax.random.normal(k_emb, (VOCAB, E), jnp.float32) * 0.1
    we = jax.random.normal(k_we, (E, H), jnp.float32) * 0.1
    be = jax.random.normal(k_be, (1, H), jnp.float32) * 0.05
    w1 = jax.random.normal(k_w1, (4 * H + 1, HID), jnp.float32) * 0.05
    b1 = jax.random.normal(k_b1, (HID,), jnp.float32) * 0.05
    w2 = jax.random.normal(k_w2, (HID, 1), jnp.float32) * 0.05
    b2 = jax.random.normal(k_b2, (1,), jnp.float32) * 0.05
    params = (we, be, w1, b1, w2, b2)

    # one-time static packing (model-load time, NOT per call)
    packed = jax.tree_util.tree_map(jax.block_until_ready, pack_params(emb_table, params))

    # deterministic inputs (the module's signature: ids + attention masks)
    input_ids_1 = jax.random.randint(k_id1, (B, S), 0, VOCAB)
    input_ids_2 = jax.random.randint(k_id2, (B, S), 0, VOCAB)
    attention_mask_1 = jnp.ones((B, S), jnp.float32)
    attention_mask_2 = jnp.ones((B, S), jnp.float32)

    fwd = jax.jit(siamese_forward)
    out = fwd(input_ids_1, attention_mask_1, input_ids_2, attention_mask_2, packed)
    out = jax.block_until_ready(out)

    # reference path (embedding gather + mask done in plain JAX for checking only)
    e1 = emb_table[input_ids_1] * attention_mask_1[..., None]
    e2 = emb_table[input_ids_2] * attention_mask_2[..., None]
    ref = reference_forward(e1, e2, params)

    assert out.shape == (B,), out.shape
    assert jnp.allclose(out, ref, atol=1e-4, rtol=1e-4), (out, ref)
    print("KERNEL_OK")
</pallas_src>

<mosaic_0001>
module attributes {stable_mosaic.version = 11 : i64} {
  func.func @siamese_kernel(%arg0: memref<32x1xi32, #tpu.memory_space<vmem>>, %arg1: memref<32x1xf32, #tpu.memory_space<vmem>>, %arg2: memref<128x32xf32, #tpu.memory_space<vmem>>, %arg3: memref<32x32xf32, #tpu.memory_space<vmem>>, %arg4: memref<4x32xf32, #tpu.memory_space<vmem>>, %arg5: memref<128x256xf32, #tpu.memory_space<vmem>>, %arg6: memref<8x256xf32, #tpu.memory_space<vmem>>, %arg7: memref<2x128xf32, #tpu.memory_space<vmem>>) attributes {dimension_semantics = [], scalar_prefetch = 0 : i64, scratch_operands = 0 : i64, tpu.core_type = #tpu.core_type<tc>} {
    %c0 = arith.constant 0 : index
    %c0_0 = arith.constant 0 : index
    %0 = vector.load %arg6[%c0, %c0_0] : memref<8x256xf32, #tpu.memory_space<vmem>>, vector<8x256xf32>
    %1 = vector.extract_strided_slice %0 {offsets = [0, 0], sizes = [1, 256], strides = [1, 1]} : vector<8x256xf32> to vector<1x256xf32>
    %2 = vector.extract_strided_slice %0 {offsets = [1, 0], sizes = [1, 256], strides = [1, 1]} : vector<8x256xf32> to vector<1x256xf32>
    %3 = vector.extract_strided_slice %0 {offsets = [2, 0], sizes = [1, 256], strides = [1, 1]} : vector<8x256xf32> to vector<1x256xf32>
    %4 = vector.extract_strided_slice %0 {offsets = [3, 0], sizes = [1, 1], strides = [1, 1]} : vector<8x256xf32> to vector<1x1xf32>
    %5 = vector.extract_strided_slice %0 {offsets = [4, 0], sizes = [1, 32], strides = [1, 1]} : vector<8x256xf32> to vector<1x32xf32>
    %c0_1 = arith.constant 0 : index
    %c0_2 = arith.constant 0 : index
    %6 = vector.load %arg0[%c0_1, %c0_2] : memref<32x1xi32, #tpu.memory_space<vmem>>, vector<32x1xi32>
    %7 = tpu.iota {dimensions = array<i32: 1>} : vector<32x128xi32>
    %8 = vector.broadcast %6 : vector<32x1xi32> to vector<32x128xi32>
    %9 = arith.cmpi eq, %7, %8 : vector<32x128xi32>
    %c0_3 = arith.constant 0 : index
    %c0_4 = arith.constant 0 : index
    %10 = vector.load %arg1[%c0_3, %c0_4] : memref<32x1xf32, #tpu.memory_space<vmem>>, vector<32x1xf32>
    %cst = arith.constant 0.000000e+00 : f32
    %11 = vector.shape_cast %10 : vector<32x1xf32> to vector<32x1xf32>
    %12 = vector.broadcast %11 : vector<32x1xf32> to vector<32x128xf32>
    %13 = vector.broadcast %cst : f32 to vector<32x128xf32>
    %14 = arith.select %9, %12, %13 : vector<32x128xi1>, vector<32x128xf32>
    %c0_5 = arith.constant 0 : index
    %c0_6 = arith.constant 0 : index
    %15 = vector.load %arg2[%c0_5, %c0_6] : memref<128x32xf32, #tpu.memory_space<vmem>>, vector<128x32xf32>
    %cst_7 = arith.constant dense<0.000000e+00> : vector<32x32xf32>
    %16 = tpu.matmul %14, %15, %cst_7 {dimension_numbers = #tpu.dot_dimension_numbers<[1], [0], [0], [1], [0, 0, 1, 1], [], []>} : vector<32x128xf32>, vector<128x32xf32>, vector<32x32xf32> -> vector<32x32xf32>
    %c0_8 = arith.constant 0 : index
    %c0_9 = arith.constant 0 : index
    %17 = vector.load %arg3[%c0_8, %c0_9] : memref<32x32xf32, #tpu.memory_space<vmem>>, vector<32x32xf32>
    %cst_10 = arith.constant dense<0.000000e+00> : vector<32x32xf32>
    %18 = tpu.matmul %16, %17, %cst_10 {dimension_numbers = #tpu.dot_dimension_numbers<[1], [0], [0], [1], [0, 0, 1, 1], [], []>} : vector<32x32xf32>, vector<32x32xf32>, vector<32x32xf32> -> vector<32x32xf32>
    %19 = vector.broadcast %5 : vector<1x32xf32> to vector<32x32xf32>
    %20 = arith.addf %18, %19 : vector<32x32xf32>
    %21 = math.tanh %20 : vector<32x32xf32>
    %c0_11 = arith.constant 0 : index
    %c0_12 = arith.constant 0 : index
    %22 = vector.load %arg4[%c0_11, %c0_12] : memref<4x32xf32, #tpu.memory_space<vmem>>, vector<4x32xf32>
    %cst_13 = arith.constant dense<0.000000e+00> : vector<4x32xf32>
    %23 = tpu.matmul %22, %21, %cst_13 {dimension_numbers = #tpu.dot_dimension_numbers<[1], [0], [0], [1], [0, 0, 1, 1], [], []>} : vector<4x32xf32>, vector<32x32xf32>, vector<4x32xf32> -> vector<4x32xf32>
    %24 = vector.extract_strided_slice %23 {offsets = [0, 0], sizes = [2, 32], strides = [1, 1]} : vector<4x32xf32> to vector<2x32xf32>
    %25 = vector.extract_strided_slice %23 {offsets = [2, 0], sizes = [2, 32], strides = [1, 1]} : vector<4x32xf32> to vector<2x32xf32>
    %26 = arith.subf %24, %25 : vector<2x32xf32>
    %27 = math.absf %26 : vector<2x32xf32>
    %28 = arith.mulf %24, %25 : vector<2x32xf32>
    %cst_14 = arith.constant dense<0.000000e+00> : vector<2xf32>
    %29 = vector.multi_reduction <add>, %28, %cst_14 [1] : vector<2x32xf32> to vector<2xf32>
    %30 = vector.shape_cast %29 : vector<2xf32> to vector<2x1xf32>
    %31 = arith.mulf %24, %24 : vector<2x32xf32>
    %cst_15 = arith.constant dense<0.000000e+00> : vector<2xf32>
    %32 = vector.multi_reduction <add>, %31, %cst_15 [1] : vector<2x32xf32> to vector<2xf32>
    %33 = vector.shape_cast %32 : vector<2xf32> to vector<2x1xf32>
    %34 = arith.mulf %25, %25 : vector<2x32xf32>
    %cst_16 = arith.constant dense<0.000000e+00> : vector<2xf32>
    %35 = vector.multi_reduction <add>, %34, %cst_16 [1] : vector<2x32xf32> to vector<2xf32>
    %36 = vector.shape_cast %35 : vector<2xf32> to vector<2x1xf32>
    %37 = arith.mulf %33, %36 : vector<2x1xf32>
    %cst_17 = arith.constant 1.000000e-16 : f32
    %38 = vector.broadcast %cst_17 : f32 to vector<2x1xf32>
    %39 = arith.maximumf %37, %38 : vector<2x1xf32>
    %40 = math.rsqrt %39 : vector<2x1xf32>
    %41 = arith.mulf %30, %40 : vector<2x1xf32>
    %42 = tpu.concatenate %24, %25, %27, %28 in 1 : vector<2x32xf32>, vector<2x32xf32>, vector<2x32xf32>, vector<2x32xf32> -> vector<2x128xf32>
    %c0_18 = arith.constant 0 : index
    %c0_19 = arith.constant 0 : index
    %43 = vector.load %arg5[%c0_18, %c0_19] : memref<128x256xf32, #tpu.memory_space<vmem>>, vector<128x256xf32>
    %cst_20 = arith.constant dense<0.000000e+00> : vector<2x256xf32>
    %44 = tpu.matmul %42, %43, %cst_20 {dimension_numbers = #tpu.dot_dimension_numbers<[1], [0], [0], [1], [0, 0, 1, 1], [], []>} : vector<2x128xf32>, vector<128x256xf32>, vector<2x256xf32> -> vector<2x256xf32>
    %45 = vector.broadcast %41 : vector<2x1xf32> to vector<2x256xf32>
    %46 = vector.broadcast %1 : vector<1x256xf32> to vector<2x256xf32>
    %47 = arith.mulf %45, %46 : vector<2x256xf32>
    %48 = arith.addf %44, %47 : vector<2x256xf32>
    %49 = vector.broadcast %2 : vector<1x256xf32> to vector<2x256xf32>
    %50 = arith.addf %48, %49 : vector<2x256xf32>
    %cst_21 = arith.constant 0.000000e+00 : f32
    %51 = vector.broadcast %cst_21 : f32 to vector<2x256xf32>
    %52 = arith.maximumf %50, %51 : vector<2x256xf32>
    %53 = vector.broadcast %3 : vector<1x256xf32> to vector<2x256xf32>
    %54 = arith.mulf %52, %53 : vector<2x256xf32>
    %cst_22 = arith.constant dense<0.000000e+00> : vector<2xf32>
    %55 = vector.multi_reduction <add>, %54, %cst_22 [1] : vector<2x256xf32> to vector<2xf32>
    %56 = vector.shape_cast %55 : vector<2xf32> to vector<2x1xf32>
    %57 = vector.broadcast %4 : vector<1x1xf32> to vector<2x1xf32>
    %58 = arith.addf %56, %57 : vector<2x1xf32>
    %59 = vector.shape_cast %58 : vector<2x1xf32> to vector<2x1xf32>
    %60 = vector.broadcast %59 : vector<2x1xf32> to vector<2x128xf32>
    %c0_23 = arith.constant 0 : index
    %c0_24 = arith.constant 0 : index
    %61 = vector.load %arg7[%c0_23, %c0_24] : memref<2x128xf32, #tpu.memory_space<vmem>>, vector<2x128xf32>
    tpu.vector_store %arg7[%c0_23, %c0_24], %60 {strides = array<i32>} : memref<2x128xf32, #tpu.memory_space<vmem>>, vector<2x128xf32>,
    return
  }
}

</mosaic_0001>

<llo_original>
// kernel: siamese_forward.1
$region0: #{siamese_forward.1}
  #allocation0 [shape = 'u32[]', space=smem, size = 0x4, offset = 0x4, fixed_abs, tag = 'smem constant byte address 0x4 - core index']
  #allocation1 [shape = 'u32[144,128]{1,0:T(1,128)}', space=vmem, size = 0x12000, scoped, tag = 'internal scratch']
  %s0 = inlined_call_operand.vmem [shape: s32[32,1], index: 0, kind: input, shape index: {}]
  %s1 = inlined_call_operand.vmem [shape: f32[32,1], index: 1, kind: input, shape index: {}]
  %s2 = inlined_call_operand.vmem [shape: f32[128,32], index: 2, kind: input, shape index: {}]
  %s3 = inlined_call_operand.hbm [shape: f32[32,32], index: 3, kind: input, shape index: {}]
  %s4 = inlined_call_operand.hbm [shape: f32[4,32], index: 4, kind: input, shape index: {}]
  %s5 = inlined_call_operand.vmem [shape: f32[128,256], index: 5, kind: input, shape index: {}]
  %s6 = inlined_call_operand.vmem [shape: f32[8,256], index: 6, kind: input, shape index: {}]
  %s7 = inlined_call_operand.vmem [shape: f32[2,128], index: 7, kind: output, shape index: {}]
  %s8 = sld [smem:[#allocation0]]
  $region46: #{siamese_forward.1} parent=0
    _
  %s10 = ssub.s32 1, %s8
  %s11 = scalar_select 0, %s10, %s8
  $region1: #{siamese_forward.1} parent=0
    #allocation2 [shape = 'u8[16384]{0}', space=vmem, size = 0x4000, scoped, tag = 'input window, operand 3, single buffered']
    #allocation3 [shape = 's32[1]{0}', space=sflag, size = 0x4, scoped, tag = 'scoped memory for siamese_forward.1']
    #allocation4 [shape = 'u8[2048]{0}', space=vmem, size = 0x800, scoped, tag = 'input window, operand 4, single buffered']
    #allocation5 [shape = 's32[1]{0}', space=sflag, size = 0x4, scoped, tag = 'scoped memory for siamese_forward.1']
    %12 = vsyncpa [#allocation3], 0
    %13 = vsyncpa [#allocation5], 0
    // Predicated region
    $region2: #{siamese_forward.1} parent=1 // pred_check
      _
    $region3: #{siamese_forward.1} parent=1 // pred_check_branch
      %15 = sbr.rel (0) target = $region5
    $region4: #{siamese_forward.1} parent=1 // pred_region
      _
    $region5: #{siamese_forward.1} parent=1 // pred_fallthru
      _
    // Predicated region
    $region6: #{siamese_forward.1} parent=1 // pred_check
      _
    $region7: #{siamese_forward.1} parent=1 // pred_check_branch
      %17 = sbr.rel (0) target = $region9
    $region8: #{siamese_forward.1} parent=1 // pred_region
      _
    $region9: #{siamese_forward.1} parent=1 // pred_fallthru
      _
    // Predicated region
    $region10: #{siamese_forward.1} parent=1 // pred_check
      _
    $region11: #{siamese_forward.1} parent=1 // pred_check_branch
      %19 = sbr.rel (0) target = $region13
    $region12: #{siamese_forward.1} parent=1 // pred_region
      _
    $region13: #{siamese_forward.1} parent=1 // pred_fallthru
      _
    // Predicated region
    $region14: #{siamese_forward.1} parent=1 // pred_check
      _
    $region15: #{siamese_forward.1} parent=1 // pred_check_branch
      %21 = sbr.rel (0) target = $region17
    $region16: #{siamese_forward.1} parent=1 // pred_region
      %s23 = ssub.s32 512, 512
      %24 = vsyncadd [#allocation3], %s23
      %s25 = sshll.u32 [#allocation2], 4
      %s26 = int_to_ptr.vmem [resolvable:$true] %s25
      %31 = dma.hbm_to_vmem [thread:$0]  %s3, 512, %s26, [#allocation3], 128, 128, 8
    $region17: #{siamese_forward.1} parent=1 // pred_fallthru
      _
    // Predicated region
    $region18: #{siamese_forward.1} parent=1 // pred_check
      _
    $region19: #{siamese_forward.1} parent=1 // pred_check_branch
      %33 = sbr.rel (0) target = $region21
    $region20: #{siamese_forward.1} parent=1 // pred_region
      %s35 = ssub.s32 64, 64
      %36 = vsyncadd [#allocation5], %s35
      %s38 = sshll.u32 [#allocation4], 4
      %s39 = int_to_ptr.vmem [resolvable:$true] %s38
      %41 = dma.hbm_to_vmem [thread:$0]  %s4, 64, %s39, [#allocation5]
    $region21: #{siamese_forward.1} parent=1 // pred_fallthru
      _
    // Predicated region
    $region22: #{siamese_forward.1} parent=1 // pred_check
      _
    $region23: #{siamese_forward.1} parent=1 // pred_check_branch
      %43 = sbr.rel (0) target = $region25
    $region24: #{siamese_forward.1} parent=1 // pred_region
      _
    $region25: #{siamese_forward.1} parent=1 // pred_fallthru
      _
    // Predicated region
    $region26: #{siamese_forward.1} parent=1 // pred_check
      _
    $region27: #{siamese_forward.1} parent=1 // pred_check_branch
      %45 = sbr.rel (0) target = $region29
    $region28: #{siamese_forward.1} parent=1 // pred_region
      _
    $region29: #{siamese_forward.1} parent=1 // pred_fallthru
      _
    // Predicated region
    $region30: #{siamese_forward.1} parent=1 // pred_check
      _
    $region31: #{siamese_forward.1} parent=1 // pred_check_branch
      %47 = sbr.rel (0) target = $region33
    $region32: #{siamese_forward.1} parent=1 // pred_region
      %48 = dma.done [#allocation3], 512
    $region33: #{siamese_forward.1} parent=1 // pred_fallthru
      _
    // Predicated region
    $region34: #{siamese_forward.1} parent=1 // pred_check
      _
    $region35: #{siamese_forward.1} parent=1 // pred_check_branch
      %50 = sbr.rel (0) target = $region37
    $region36: #{siamese_forward.1} parent=1 // pred_region
      %51 = dma.done [#allocation5], 64
    $region37: #{siamese_forward.1} parent=1 // pred_fallthru
      _
    %v52 = vld [vmem:[%s6] sm:$0xff]
    %v53 = vld [vmem:[%s6 + $0x8] sm:$0xff]
    %v54 = vld [vmem:[%s0] sm:$0xff]
    %v55 = vld [vmem:[%s0 + $0x8] sm:$0xff]
    %v56 = vld [vmem:[%s0 + $0x10] sm:$0xff]
    %v57 = vld [vmem:[%s0 + $0x18] sm:$0xff]
    %v58 = vlaneseq
    %v59 = vand.u32 %v58, 127
    %60 = vset.pattern.permute.xlu0 0
    %61 = vperm.xlu0 %60, %v54
    %v62 = vpop.permute.xlu0 %61
    %63 = vset.pattern.permute.xlu0 0
    %64 = vperm.xlu0 %63, %v55
    %v65 = vpop.permute.xlu0 %64
    %66 = vset.pattern.permute.xlu0 0
    %67 = vperm.xlu0 %66, %v56
    %v68 = vpop.permute.xlu0 %67
    %69 = vset.pattern.permute.xlu0 0
    %70 = vperm.xlu0 %69, %v57
    %v71 = vpop.permute.xlu0 %70
    %vm72 = vcmp.eq.s32.totalorder %v59, %v62
    %vm73 = vcmp.eq.s32.totalorder %v59, %v65
    %vm74 = vcmp.eq.s32.totalorder %v59, %v68
    %vm75 = vcmp.eq.s32.totalorder %v59, %v71
    %v76 = vld [vmem:[%s1] sm:$0xff]
    %v77 = vld [vmem:[%s1 + $0x8] sm:$0xff]
    %v78 = vld [vmem:[%s1 + $0x10] sm:$0xff]
    %v79 = vld [vmem:[%s1 + $0x18] sm:$0xff]
    %81 = vset.pattern.permute.xlu0 0
    %82 = vperm.xlu0 %81, %v76
    %v83 = vpop.permute.xlu0 %82
    %86 = vset.pattern.permute.xlu0 0
    %87 = vperm.xlu0 %86, %v77
    %v88 = vpop.permute.xlu0 %87
    %91 = vset.pattern.permute.xlu0 0
    %92 = vperm.xlu0 %91, %v78
    %v93 = vpop.permute.xlu0 %92
    %96 = vset.pattern.permute.xlu0 0
    %97 = vperm.xlu0 %96, %v79
    %v98 = vpop.permute.xlu0 %97
    %v100 = vsel %vm72, %v83, 0.0
    %v101 = vsel %vm73, %v88, 0.0
    %v102 = vsel %vm74, %v93, 0.0
    %v103 = vsel %vm75, %v98, 0.0
    %v104 = vld [vmem:[%s2] sm:$0xff]
    %v105 = vld [vmem:[%s2 + $0x8] sm:$0xff]
    %v106 = vld [vmem:[%s2 + $0x10] sm:$0xff]
    %v107 = vld [vmem:[%s2 + $0x18] sm:$0xff]
    %v108 = vld [vmem:[%s2 + $0x20] sm:$0xff]
    %v109 = vld [vmem:[%s2 + $0x28] sm:$0xff]
    %v110 = vld [vmem:[%s2 + $0x30] sm:$0xff]
    %v111 = vld [vmem:[%s2 + $0x38] sm:$0xff]
    %v112 = vld [vmem:[%s2 + $0x40] sm:$0xff]
    %v113 = vld [vmem:[%s2 + $0x48] sm:$0xff]
    %v114 = vld [vmem:[%s2 + $0x50] sm:$0xff]
    %v115 = vld [vmem:[%s2 + $0x58] sm:$0xff]
    %v116 = vld [vmem:[%s2 + $0x60] sm:$0xff]
    %v117 = vld [vmem:[%s2 + $0x68] sm:$0xff]
    %v118 = vld [vmem:[%s2 + $0x70] sm:$0xff]
    %v119 = vld [vmem:[%s2 + $0x78] sm:$0xff]
    %120 = vmatprep.subr.mxu0 0.0
    %121 = vmatpush1.msra.mxu0 %v104
    %122 = vmatprep.subr.mxu0 0.0
    %123 = vmatpush1.msra.mxu0 %v105
    %124 = vmatprep.subr.mxu0 0.0
    %125 = vmatpush1.msra.mxu0 %v106
    %126 = vmatprep.subr.mxu0 0.0
    %127 = vmatpush1.msra.mxu0 %v107
    %128 = vmatprep.subr.mxu0 0.0
    %129 = vmatpush1.msra.mxu0 %v108
    %130 = vmatprep.subr.mxu0 0.0
    %131 = vmatpush1.msra.mxu0 %v109
    %132 = vmatprep.subr.mxu0 0.0
    %133 = vmatpush1.msra.mxu0 %v110
    %134 = vmatprep.subr.mxu0 0.0
    %135 = vmatpush1.msra.mxu0 %v111
    %136 = vmatprep.subr.mxu0 0.0
    %137 = vmatpush1.msra.mxu0 %v112
    %138 = vmatprep.subr.mxu0 0.0
    %139 = vmatpush1.msra.mxu0 %v113
    %140 = vmatprep.subr.mxu0 0.0
    %141 = vmatpush1.msra.mxu0 %v114
    %142 = vmatprep.subr.mxu0 0.0
    %143 = vmatpush1.msra.mxu0 %v115
    %144 = vmatprep.subr.mxu0 0.0
    %145 = vmatpush1.msra.mxu0 %v116
    %146 = vmatprep.subr.mxu0 0.0
    %147 = vmatpush1.msra.mxu0 %v117
    %148 = vmatprep.subr.mxu0 0.0
    %149 = vmatpush1.msra.mxu0 %v118
    %150 = vmatprep.subr.mxu0 0.0
    %151 = vmatpush1.msra.mxu0 %v119
    %152 = vmatprep.subr.mxu0 0.0
    %153 = vmatpush1.msra.mxu0 0.0
    %154 = vmatprep.subr.mxu0 0.0
    %155 = vmatpush1.msra.mxu0 0.0
    %156 = vmatprep.subr.mxu0 0.0
    %157 = vmatpush1.msra.mxu0 0.0
    %158 = vmatprep.subr.mxu0 0.0
    %159 = vmatpush1.msra.mxu0 0.0
    %160 = vmatprep.subr.mxu0 0.0
    %161 = vmatpush1.msra.mxu0 0.0
    %162 = vmatprep.subr.mxu0 0.0
    %163 = vmatpush1.msra.mxu0 0.0
    %164 = vmatprep.subr.mxu0 0.0
    %165 = vmatpush1.msra.mxu0 0.0
    %166 = vmatprep.subr.mxu0 0.0
    %167 = vmatpush1.msra.mxu0 0.0
    %168 = vmatprep.subr.mxu0 0.0
    %169 = vmatpush1.msra.mxu0 0.0
    %170 = vmatprep.subr.mxu0 0.0
    %171 = vmatpush1.msra.mxu0 0.0
    %172 = vmatprep.subr.mxu0 0.0
    %173 = vmatpush1.msra.mxu0 0.0
    %174 = vmatprep.subr.mxu0 0.0
    %175 = vmatpush1.msra.mxu0 0.0
    %176 = vmatprep.subr.mxu0 0.0
    %177 = vmatpush1.msra.mxu0 0.0
    %178 = vmatprep.subr.mxu0 0.0
    %179 = vmatpush1.msra.mxu0 0.0
    %180 = vmatprep.subr.mxu0 0.0
    %181 = vmatpush1.msra.mxu0 0.0
    %182 = vmatprep.subr.mxu0 0.0
    %183 = vmatpush1.msra.mxu0 0.0
    %184 = vmatprep.mubr.f32.mxu0 0.0
    %185 = vmatmul.mubr.f32.gmra.mrb[0].mxu0 %v100
    %v186 = vpop.f32.mrb[0].mxu0
    %v187 = vadd.f32 0.0, %v186
    %v188 = vpop.f32.mrb[0].mxu0
    %189 = vmatprep.mubr.f32.mxu0 0.0
    %190 = vmatmul.mubr.f32.gmra.mrb[0].mxu0 %v101
    %v191 = vpop.f32.mrb[0].mxu0
    %v192 = vadd.f32 0.0, %v191
    %v193 = vpop.f32.mrb[0].mxu0
    %194 = vmatprep.mubr.f32.mxu0 0.0
    %195 = vmatmul.mubr.f32.gmra.mrb[0].mxu0 %v102
    %v196 = vpop.f32.mrb[0].mxu0
    %v197 = vadd.f32 0.0, %v196
    %v198 = vpop.f32.mrb[0].mxu0
    %199 = vmatprep.mubr.f32.mxu0 0.0
    %200 = vmatmul.mubr.f32.gmra.mrb[0].mxu0 %v103
    %v201 = vpop.f32.mrb[0].mxu0
    %v202 = vadd.f32 0.0, %v201
    %v203 = vpop.f32.mrb[0].mxu0
    %204 = vdwg.mxu0
    %v205 = vld [vmem:[#allocation2] sm:$0xff]
    %v206 = vld [vmem:[#allocation2 + $0x8] sm:$0xff]
    %v207 = vld [vmem:[#allocation2 + $0x10] sm:$0xff]
    %v208 = vld [vmem:[#allocation2 + $0x18] sm:$0xff]
    %v209 = vlaneseq
    %v210 = vshrl.u32 %v209, 7
    %v211 = vsub.s32 4, %v210
    %v212 = vrot.slane %v52, %v211
    %vm213 = vcmask 261120
    %v215 = vsel %vm213, %v187, 0
    %v218 = vsel %vm213, %v192, 0
    %v221 = vsel %vm213, %v197, 0
    %v224 = vsel %vm213, %v202, 0
    %226 = vmatprep.subr.mxu0 0.0
    %227 = vmatpush1.msra.mxu0 %v205
    %228 = vmatprep.subr.mxu0 0.0
    %229 = vmatpush1.msra.mxu0 %v206
    %230 = vmatprep.subr.mxu0 0.0
    %231 = vmatpush1.msra.mxu0 %v207
    %232 = vmatprep.subr.mxu0 0.0
    %233 = vmatpush1.msra.mxu0 %v208
    %234 = vmatprep.subr.mxu0 0.0
    %235 = vmatpush1.msra.mxu0 0.0
    %236 = vmatprep.subr.mxu0 0.0
    %237 = vmatpush1.msra.mxu0 0.0
    %238 = vmatprep.subr.mxu0 0.0
    %239 = vmatpush1.msra.mxu0 0.0
    %240 = vmatprep.subr.mxu0 0.0
    %241 = vmatpush1.msra.mxu0 0.0
    %242 = vmatprep.subr.mxu0 0.0
    %243 = vmatpush1.msra.mxu0 0.0
    %244 = vmatprep.subr.mxu0 0.0
    %245 = vmatpush1.msra.mxu0 0.0
    %246 = vmatprep.subr.mxu0 0.0
    %247 = vmatpush1.msra.mxu0 0.0
    %248 = vmatprep.subr.mxu0 0.0
    %249 = vmatpush1.msra.mxu0 0.0
    %250 = vmatprep.subr.mxu0 0.0
    %251 = vmatpush1.msra.mxu0 0.0
    %252 = vmatprep.subr.mxu0 0.0
    %253 = vmatpush1.msra.mxu0 0.0
    %254 = vmatprep.subr.mxu0 0.0
    %255 = vmatpush1.msra.mxu0 0.0
    %256 = vmatprep.subr.mxu0 0.0
    %257 = vmatpush1.msra.mxu0 0.0
    %258 = vmatprep.subr.mxu0 0.0
    %259 = vmatpush1.msra.mxu0 0.0
    %260 = vmatprep.subr.mxu0 0.0
    %261 = vmatpush1.msra.mxu0 0.0
    %262 = vmatprep.subr.mxu0 0.0
    %263 = vmatpush1.msra.mxu0 0.0
    %264 = vmatprep.subr.mxu0 0.0
    %265 = vmatpush1.msra.mxu0 0.0
    %266 = vmatprep.subr.mxu0 0.0
    %267 = vmatpush1.msra.mxu0 0.0
    %268 = vmatprep.subr.mxu0 0.0
    %269 = vmatpush1.msra.mxu0 0.0
    %270 = vmatprep.subr.mxu0 0.0
    %271 = vmatpush1.msra.mxu0 0.0
    %272 = vmatprep.subr.mxu0 0.0
    %273 = vmatpush1.msra.mxu0 0.0
    %274 = vmatprep.subr.mxu0 0.0
    %275 = vmatpush1.msra.mxu0 0.0
    %276 = vmatprep.subr.mxu0 0.0
    %277 = vmatpush1.msra.mxu0 0.0
    %278 = vmatprep.subr.mxu0 0.0
    %279 = vmatpush1.msra.mxu0 0.0
    %280 = vmatprep.subr.mxu0 0.0
    %281 = vmatpush1.msra.mxu0 0.0
    %282 = vmatprep.subr.mxu0 0.0
    %283 = vmatpush1.msra.mxu0 0.0
    %284 = vmatprep.subr.mxu0 0.0
    %285 = vmatpush1.msra.mxu0 0.0
    %286 = vmatprep.subr.mxu0 0.0
    %287 = vmatpush1.msra.mxu0 0.0
    %288 = vmatprep.subr.mxu0 0.0
    %289 = vmatpush1.msra.mxu0 0.0
    %290 = vmatprep.mubr.f32.mxu0 0.0
    %291 = vmatmul.mubr.f32.gmra.mrb[0].mxu0 %v215
    %v292 = vpop.f32.mrb[0].mxu0
    %v293 = vadd.f32 %v212, %v292
    %v294 = vpop.f32.mrb[0].mxu0
    %295 = vmatprep.mubr.f32.mxu0 0.0
    %296 = vmatmul.mubr.f32.gmra.mrb[0].mxu0 %v218
    %v297 = vpop.f32.mrb[0].mxu0
    %v298 = vadd.f32 %v212, %v297
    %v299 = vpop.f32.mrb[0].mxu0
    %300 = vmatprep.mubr.f32.mxu0 0.0
    %301 = vmatmul.mubr.f32.gmra.mrb[0].mxu0 %v221
    %v302 = vpop.f32.mrb[0].mxu0
    %v303 = vadd.f32 %v212, %v302
    %v304 = vpop.f32.mrb[0].mxu0
    %305 = vmatprep.mubr.f32.mxu0 0.0
    %306 = vmatmul.mubr.f32.gmra.mrb[0].mxu0 %v224
    %v307 = vpop.f32.mrb[0].mxu0
    %v308 = vadd.f32 %v212, %v307
    %v309 = vpop.f32.mrb[0].mxu0
    %310 = vdwg.mxu0
    %v311 = vtanh.pop %v293
    %v312 = vtanh.pop %v298
    %v313 = vtanh.pop %v303
    %v314 = vtanh.pop %v308
    %v315 = vld [vmem:[#allocation4] sm:$0xf]
    %v317 = vsel %vm213, %v315, 0
    %319 = vmatprep.subr.mxu0 0.0
    %320 = vmatpush1.msra.mxu0 %v311
    %321 = vmatprep.subr.mxu0 0.0
    %322 = vmatpush1.msra.mxu0 %v312
    %323 = vmatprep.subr.mxu0 0.0
    %324 = vmatpush1.msra.mxu0 %v313
    %325 = vmatprep.subr.mxu0 0.0
    %326 = vmatpush1.msra.mxu0 %v314
    %327 = vmatprep.subr.mxu0 0.0
    %328 = vmatpush1.msra.mxu0 0.0
    %329 = vmatprep.subr.mxu0 0.0
    %330 = vmatpush1.msra.mxu0 0.0
    %331 = vmatprep.subr.mxu0 0.0
    %332 = vmatpush1.msra.mxu0 0.0
    %333 = vmatprep.subr.mxu0 0.0
    %334 = vmatpush1.msra.mxu0 0.0
    %335 = vmatprep.subr.mxu0 0.0
    %336 = vmatpush1.msra.mxu0 0.0
    %337 = vmatprep.subr.mxu0 0.0
    %338 = vmatpush1.msra.mxu0 0.0
    %339 = vmatprep.subr.mxu0 0.0
    %340 = vmatpush1.msra.mxu0 0.0
    %341 = vmatprep.subr.mxu0 0.0
    %342 = vmatpush1.msra.mxu0 0.0
    %343 = vmatprep.subr.mxu0 0.0
    %344 = vmatpush1.msra.mxu0 0.0
    %345 = vmatprep.subr.mxu0 0.0
    %346 = vmatpush1.msra.mxu0 0.0
    %347 = vmatprep.subr.mxu0 0.0
    %348 = vmatpush1.msra.mxu0 0.0
    %349 = vmatprep.subr.mxu0 0.0
    %350 = vmatpush1.msra.mxu0 0.0
    %351 = vmatprep.subr.mxu0 0.0
    %352 = vmatpush1.msra.mxu0 0.0
    %353 = vmatprep.subr.mxu0 0.0
    %354 = vmatpush1.msra.mxu0 0.0
    %355 = vmatprep.subr.mxu0 0.0
    %356 = vmatpush1.msra.mxu0 0.0
    %357 = vmatprep.subr.mxu0 0.0
    %358 = vmatpush1.msra.mxu0 0.0
    %359 = vmatprep.subr.mxu0 0.0
    %360 = vmatpush1.msra.mxu0 0.0
    %361 = vmatprep.subr.mxu0 0.0
    %362 = vmatpush1.msra.mxu0 0.0
    %363 = vmatprep.subr.mxu0 0.0
    %364 = vmatpush1.msra.mxu0 0.0
    %365 = vmatprep.subr.mxu0 0.0
    %366 = vmatpush1.msra.mxu0 0.0
    %367 = vmatprep.subr.mxu0 0.0
    %368 = vmatpush1.msra.mxu0 0.0
    %369 = vmatprep.subr.mxu0 0.0
    %370 = vmatpush1.msra.mxu0 0.0
    %371 = vmatprep.subr.mxu0 0.0
    %372 = vmatpush1.msra.mxu0 0.0
    %373 = vmatprep.subr.mxu0 0.0
    %374 = vmatpush1.msra.mxu0 0.0
    %375 = vmatprep.subr.mxu0 0.0
    %376 = vmatpush1.msra.mxu0 0.0
    %377 = vmatprep.subr.mxu0 0.0
    %378 = vmatpush1.msra.mxu0 0.0
    %379 = vmatprep.subr.mxu0 0.0
    %380 = vmatpush1.msra.mxu0 0.0
    %381 = vmatprep.subr.mxu0 0.0
    %382 = vmatpush1.msra.mxu0 0.0
    %383 = vmatprep.mubr.f32.mxu0 0.0
    %384 = vmatmul.mubr.f32.gmra.mrb[0].mxu0 %v317
    %v385 = vpop.f32.mrb[0].mxu0
    %v386 = vadd.f32 0.0, %v385
    %v387 = vpop.f32.mrb[0].mxu0
    %388 = vdwg.mxu0
    %v390 = vrot.slane %v386, 2
    %v392 = vsub.f32 %v386, %v390
    %v393 = vand.u32 2147483647, %v392
    %v394 = vmul.f32 %v386, %v390
    %vm395 = vcmask 254976
    %v396 = vsel %vm395, %v394, 0.0
    %397 = vadd.xlane.f32.xlu0 %v396
    %v398 = vpop.xlane.xlu0 %397
    %v399 = vmul.f32 %v386, %v386
    %v400 = vsel %vm395, %v399, 0.0
    %401 = vadd.xlane.f32.xlu0 %v400
    %v402 = vpop.xlane.xlu0 %401
    %vm403 = vcmask 257026
    %v404 = vsel %vm403, %v399, 0.0
    %405 = vadd.xlane.f32.xlu0 %v404
    %v406 = vpop.xlane.xlu0 %405
    %v408 = vrot.slane %v406, 2
    %v410 = vmul.f32 %v402, %v408
    %v411 = vmax.f32 %v410, 1e-16
    %v412 = vrsqrt.pop %v411
    %v413 = vmul.f32 %v398, %v412
    %414 = vrot.lane.b32.xlu0 %v390, 32
    %v415 = vpop.permute.xlu0 %414
    %418 = vrot.lane.b32.xlu0 %v393, 64
    %v419 = vpop.permute.xlu0 %418
    %422 = vrot.lane.b32.xlu0 %v394, 96
    %v423 = vpop.permute.xlu0 %422
    %v425 = vsel %vm213, %v386, %v415
    %vm426 = vcmask 523264
    %v427 = vsel %vm426, %v425, %v419
    %vm428 = vcmask 785408
    %v429 = vsel %vm428, %v427, %v423
    %v430 = vld [vmem:[%s5] sm:$0xff]
    %v431 = vld [vmem:[%s5 + $0x8] sm:$0xff]
    %v432 = vld [vmem:[%s5 + $0x10] sm:$0xff]
    %v433 = vld [vmem:[%s5 + $0x18] sm:$0xff]
    %v434 = vld [vmem:[%s5 + $0x20] sm:$0xff]
    %v435 = vld [vmem:[%s5 + $0x28] sm:$0xff]
    %v436 = vld [vmem:[%s5 + $0x30] sm:$0xff]
    %v437 = vld [vmem:[%s5 + $0x38] sm:$0xff]
    %v438 = vld [vmem:[%s5 + $0x40] sm:$0xff]
    %v439 = vld [vmem:[%s5 + $0x48] sm:$0xff]
    %v440 = vld [vmem:[%s5 + $0x50] sm:$0xff]
    %v441 = vld [vmem:[%s5 + $0x58] sm:$0xff]
    %v442 = vld [vmem:[%s5 + $0x60] sm:$0xff]
    %v443 = vld [vmem:[%s5 + $0x68] sm:$0xff]
    %v444 = vld [vmem:[%s5 + $0x70] sm:$0xff]
    %v445 = vld [vmem:[%s5 + $0x78] sm:$0xff]
    %v446 = vld [vmem:[%s5 + $0x80] sm:$0xff]
    %v447 = vld [vmem:[%s5 + $0x88] sm:$0xff]
    %v448 = vld [vmem:[%s5 + $0x90] sm:$0xff]
    %v449 = vld [vmem:[%s5 + $0x98] sm:$0xff]
    %v450 = vld [vmem:[%s5 + $0xa0] sm:$0xff]
    %v451 = vld [vmem:[%s5 + $0xa8] sm:$0xff]
    %v452 = vld [vmem:[%s5 + $0xb0] sm:$0xff]
    %v453 = vld [vmem:[%s5 + $0xb8] sm:$0xff]
    %v454 = vld [vmem:[%s5 + $0xc0] sm:$0xff]
    %v455 = vld [vmem:[%s5 + $0xc8] sm:$0xff]
    %v456 = vld [vmem:[%s5 + $0xd0] sm:$0xff]
    %v457 = vld [vmem:[%s5 + $0xd8] sm:$0xff]
    %v458 = vld [vmem:[%s5 + $0xe0] sm:$0xff]
    %v459 = vld [vmem:[%s5 + $0xe8] sm:$0xff]
    %v460 = vld [vmem:[%s5 + $0xf0] sm:$0xff]
    %v461 = vld [vmem:[%s5 + $0xf8] sm:$0xff]
    %463 = vset.pattern.permute.xlu0 0
    %464 = vperm.xlu0 %463, %v413
    %v465 = vpop.permute.xlu0 %464
    %v467 = vlaneseq
    %v468 = vshrl.u32 %v467, 7
    %v469 = vsub.s32 0, %v468
    %v470 = vrot.slane %v52, %v469
    %v471 = vlaneseq
    %v472 = vshrl.u32 %v471, 7
    %v473 = vsub.s32 0, %v472
    %v474 = vrot.slane %v53, %v473
    %v475 = vmul.f32 %v465, %v470
    %v476 = vmul.f32 %v465, %v474
    %477 = vmatprep.subr.mxu0 %v431
    %478 = vmatpush1.msra.mxu0 %v430
    %479 = vmatprep.subr.mxu0 %v433
    %480 = vmatpush1.msra.mxu0 %v432
    %481 = vmatprep.subr.mxu0 %v435
    %482 = vmatpush1.msra.mxu0 %v434
    %483 = vmatprep.subr.mxu0 %v437
    %484 = vmatpush1.msra.mxu0 %v436
    %485 = vmatprep.subr.mxu0 %v439
    %486 = vmatpush1.msra.mxu0 %v438
    %487 = vmatprep.subr.mxu0 %v441
    %488 = vmatpush1.msra.mxu0 %v440
    %489 = vmatprep.subr.mxu0 %v443
    %490 = vmatpush1.msra.mxu0 %v442
    %491 = vmatprep.subr.mxu0 %v445
    %492 = vmatpush1.msra.mxu0 %v444
    %493 = vmatprep.subr.mxu0 %v447
    %494 = vmatpush1.msra.mxu0 %v446
    %495 = vmatprep.subr.mxu0 %v449
    %496 = vmatpush1.msra.mxu0 %v448
    %497 = vmatprep.subr.mxu0 %v451
    %498 = vmatpush1.msra.mxu0 %v450
    %499 = vmatprep.subr.mxu0 %v453
    %500 = vmatpush1.msra.mxu0 %v452
    %501 = vmatprep.subr.mxu0 %v455
    %502 = vmatpush1.msra.mxu0 %v454
    %503 = vmatprep.subr.mxu0 %v457
    %504 = vmatpush1.msra.mxu0 %v456
    %505 = vmatprep.subr.mxu0 %v459
    %506 = vmatpush1.msra.mxu0 %v458
    %507 = vmatprep.subr.mxu0 %v461
    %508 = vmatpush1.msra.mxu0 %v460
    %509 = vmatprep.subr.mxu0 0.0
    %510 = vmatpush1.msra.mxu0 0.0
    %511 = vmatprep.subr.mxu0 0.0
    %512 = vmatpush1.msra.mxu0 0.0
    %513 = vmatprep.subr.mxu0 0.0
    %514 = vmatpush1.msra.mxu0 0.0
    %515 = vmatprep.subr.mxu0 0.0
    %516 = vmatpush1.msra.mxu0 0.0
    %517 = vmatprep.subr.mxu0 0.0
    %518 = vmatpush1.msra.mxu0 0.0
    %519 = vmatprep.subr.mxu0 0.0
    %520 = vmatpush1.msra.mxu0 0.0
    %521 = vmatprep.subr.mxu0 0.0
    %522 = vmatpush1.msra.mxu0 0.0
    %523 = vmatprep.subr.mxu0 0.0
    %524 = vmatpush1.msra.mxu0 0.0
    %525 = vmatprep.subr.mxu0 0.0
    %526 = vmatpush1.msra.mxu0 0.0
    %527 = vmatprep.subr.mxu0 0.0
    %528 = vmatpush1.msra.mxu0 0.0
    %529 = vmatprep.subr.mxu0 0.0
    %530 = vmatpush1.msra.mxu0 0.0
    %531 = vmatprep.subr.mxu0 0.0
    %532 = vmatpush1.msra.mxu0 0.0
    %533 = vmatprep.subr.mxu0 0.0
    %534 = vmatpush1.msra.mxu0 0.0
    %535 = vmatprep.subr.mxu0 0.0
    %536 = vmatpush1.msra.mxu0 0.0
    %537 = vmatprep.subr.mxu0 0.0
    %538 = vmatpush1.msra.mxu0 0.0
    %539 = vmatprep.subr.mxu0 0.0
    %540 = vmatpush1.msra.mxu0 0.0
    %541 = vmatprep.mubr.f32.mxu0 0.0
    %542 = vmatmul.mubr.f32.gmra.mrb[0].mxu0 %v429
    %v543 = vpop.f32.mrb[0].mxu0
    %v544 = vadd.f32 %v475, %v543
    %v545 = vpop.f32.mrb[0].mxu0
    %v546 = vadd.f32 %v476, %v545
    %547 = vdwg.mxu0
    %v548 = vlaneseq
    %v549 = vshrl.u32 %v548, 7
    %v550 = vsub.s32 1, %v549
    %v551 = vrot.slane %v52, %v550
    %v552 = vlaneseq
    %v553 = vshrl.u32 %v552, 7
    %v554 = vsub.s32 1, %v553
    %v555 = vrot.slane %v53, %v554
    %v556 = vadd.f32 %v544, %v551
    %v557 = vadd.f32 %v546, %v555
    %v558 = vmax.f32 %v556, 0.0
    %v559 = vmax.f32 %v557, 0.0
    %v560 = vlaneseq
    %v561 = vshrl.u32 %v560, 7
    %v562 = vsub.s32 2, %v561
    %v563 = vrot.slane %v52, %v562
    %v564 = vlaneseq
    %v565 = vshrl.u32 %v564, 7
    %v566 = vsub.s32 2, %v565
    %v567 = vrot.slane %v53, %v566
    %v568 = vmul.f32 %v558, %v563
    %v569 = vmul.f32 %v559, %v567
    %vm570 = vcmask 1041408
    %v571 = vsel %vm570, %v568, 0.0
    %v572 = vsel %vm570, %v569, 0.0
    %v573 = vadd.f32 %v571, %v572
    %574 = vadd.xlane.f32.xlu0 %v573
    %v575 = vpop.xlane.xlu0 %574
    %v576 = vlaneseq
    %v577 = vshrl.u32 %v576, 7
    %v578 = vsub.s32 3, %v577
    %v579 = vrot.slane %v52, %v578
    %v580 = vadd.f32 %v575, %v579
    %582 = vset.pattern.permute.xlu0 0
    %583 = vperm.xlu0 %582, %v580
    %v584 = vpop.permute.xlu0 %583
    %586 = vst [vmem:[%s7] sm:$0x3] %v584
    // Predicated region
    $region38: #{siamese_forward.1} parent=1 // pred_check
      _
    $region39: #{siamese_forward.1} parent=1 // pred_check_branch
      %588 = sbr.rel (0) target = $region41
    $region40: #{siamese_forward.1} parent=1 // pred_region
      _
    $region41: #{siamese_forward.1} parent=1 // pred_fallthru
      _
    // Predicated region
    $region42: #{siamese_forward.1} parent=1 // pred_check
      _
    $region43: #{siamese_forward.1} parent=1 // pred_check_branch
      %590 = sbr.rel (0) target = $region45
    $region44: #{siamese_forward.1} parent=1 // pred_region
      _
    $region45: #{siamese_forward.1} parent=1 // pred_fallthru
      _
    %591 = vsyncpa [#allocation3], 1
    %592 = vsyncpa [#allocation5], 1

</llo_original>
